<compile_context>
chip_gen: v7x
topology: tpu7x:2x2x1
jax: 0.10.0
libtpu: 0.0.40
codegen_flags: <defaults>
</compile_context>

<pallas_src>
import functools
import math

import jax
import jax.numpy as jnp
from jax.experimental import pallas as pl
from jax.experimental.pallas import tpu as pltpu

HIDDEN = 32  # hidden width of the synthetic V_nn MLP


# --------------------------------------------------------------------------
# Chip-generation hints (best-effort; fall back to the safe f32 / 1-step path).
# --------------------------------------------------------------------------
def _device_kind():
    try:
        return jax.devices()[0].device_kind.lower()
    except Exception:
        return ""


def _has_bf16_eup():
    # bf16 VPU/EUP (and native bf16 MXU path) exist on v6e and v7x, not v5e.
    kind = _device_kind()
    return ("v6" in kind) or ("v7" in kind)


def _dual_tensorcore():
    # v7x has 2 TensorCores per chip; the parallel grid axis is how we use both.
    return "v7" in _device_kind()


def default_compute_dtype():
    return jnp.bfloat16 if _has_bf16_eup() else jnp.float32


# --------------------------------------------------------------------------
# Pallas kernel: whole MLP in one kernel, batch on the lane axis.
#   s_ref, t_ref : (1, tile)      inputs S and tau (lane-dense rows)
#   w1s_ref      : (H, 1)         layer-1 weight column for S
#   w1t_ref      : (H, 1)         layer-1 weight column for tau
#   b1_ref       : (H, 1)
#   w2_ref       : (H, H)
#   b2_ref       : (H, 1)
#   w3t_ref      : (H, 1)         layer-3 weight, pre-transposed
#   b3_ref       : (1, 1)
#   o_ref        : (1, tile)      output V (lane-dense)
# compute_dtype: f32 on v5e, bf16 on v6e/v7x (activations + MXU operands).
# --------------------------------------------------------------------------
def pinn_mlp_kernel(s_ref, t_ref, w1s_ref, w1t_ref, b1_ref, w2_ref, b2_ref,
                    w3t_ref, b3_ref, o_ref, *, compute_dtype):
    s = s_ref[...]                                   # (1, tile)
    t = t_ref[...]                                   # (1, tile)

    # Layer 1 (in=2): VPU broadcast mul/add instead of a K=2 MXU matmul.
    #   pre1[h, n] = w1[h,0]*S[n] + w1[h,1]*tau[n] + b1[h]
    pre1 = w1s_ref[...] * s + w1t_ref[...] * t + b1_ref[...]          # (H, tile) f32
    h1 = jnp.tanh(pre1.astype(compute_dtype))                         # (H, tile) cd

    # Layer 2 (HxH): MXU matmul (bf16 operands on v6e/v7x), f32 accumulation.
    pre2 = jnp.dot(w2_ref[...].astype(compute_dtype), h1,
                   preferred_element_type=jnp.float32) + b2_ref[...]  # (H, tile) f32
    h2 = jnp.tanh(pre2.astype(compute_dtype))                         # (H, tile) cd

    # Layer 3 (out=1): VPU mul + XLU sublane reduce in f32.
    out = jnp.sum(w3t_ref[...] * h2.astype(jnp.float32),
                  axis=0, keepdims=True) + b3_ref[...]                # (1, tile)
    o_ref[...] = out.astype(o_ref.dtype)


def mlp_forward_pallas(S, tau, params, *, tile=8192, compute_dtype=None):
    """S, tau: (N, 1) float32 column vectors.  Returns (N, 1) float32 = V_nn([S, tau])."""
    N = S.shape[0]
    w1, b1, w2, b2, w3t, b3 = params
    H = w1.shape[0]
    if compute_dtype is None:
        compute_dtype = default_compute_dtype()

    # ---- Tile / grid selection -------------------------------------------
    # Lane-multiple tile, no larger than the (padded) batch.  Large default
    # tile amortizes per-grid-step overhead; intermediates stay VMEM-safe.
    n128 = int(pl.cdiv(N, 128) * 128)
    tile = max(128, int(min(int(tile), n128)))
    # v7x dual TensorCore: keep >= 2 parallel grid steps when there is enough
    # work (otherwise a single full-batch tile serializes on one core).
    if _dual_tensorcore() and tile == n128 and n128 >= 4096:
        tile = ((n128 // 2 + 127) // 128) * 128
    n_pad = int(pl.cdiv(n128, tile) * tile)

    # ---- Host-side layout prep (traced XLA ops, not in-kernel) ------------
    s_row = S.astype(jnp.float32).reshape(1, N)        # (N,1) column -> (1,N) row
    t_row = tau.astype(jnp.float32).reshape(1, N)
    if n_pad != N:
        s_row = jnp.pad(s_row, ((0, 0), (0, n_pad - N)))
        t_row = jnp.pad(t_row, ((0, 0), (0, n_pad - N)))

    # Pre-split w1 into two (H, 1) columns so the kernel never lane-slices.
    w1s = w1[:, 0:1]
    w1t = w1[:, 1:2]

    grid = (n_pad // tile,)
    full = lambda i: (0, 0)  # weights resident across all batch tiles

    kernel = functools.partial(pinn_mlp_kernel, compute_dtype=compute_dtype)

    out = pl.pallas_call(
        kernel,
        out_shape=jax.ShapeDtypeStruct((1, n_pad), jnp.float32),
        grid_spec=pltpu.PrefetchScalarGridSpec(
            num_scalar_prefetch=0,
            grid=grid,
            in_specs=[
                pl.BlockSpec((1, tile), lambda i: (0, i)),   # S row tile
                pl.BlockSpec((1, tile), lambda i: (0, i)),   # tau row tile
                pl.BlockSpec((H, 1), full),                  # w1 column for S
                pl.BlockSpec((H, 1), full),                  # w1 column for tau
                pl.BlockSpec((H, 1), full),                  # b1
                pl.BlockSpec((H, H), full),                  # w2
                pl.BlockSpec((H, 1), full),                  # b2
                pl.BlockSpec((H, 1), full),                  # w3 (pre-transposed)
                pl.BlockSpec((1, 1), full),                  # b3
            ],
            out_specs=pl.BlockSpec((1, tile), lambda i: (0, i)),
        ),
        compiler_params=pltpu.CompilerParams(
            dimension_semantics=("parallel",),
        ),
        # ~2240 flops, 64 tanh, 12 bytes of HBM traffic per batch point.
        cost_estimate=pl.CostEstimate(
            flops=2240 * n_pad,
            transcendentals=64 * n_pad,
            bytes_accessed=12 * n_pad,
        ),
    )(s_row, t_row, w1s, w1t, b1, w2, b2, w3t, b3)

    return out[:, :N].reshape(N, 1)


# --------------------------------------------------------------------------
# Deterministic parameter init, matching torch.nn.Linear's default
# U(-1/sqrt(fan_in), 1/sqrt(fan_in)).  Weights stored (out, in) like PyTorch;
# biases stored as (out, 1) columns; layer-3 weight pre-transposed to (H, 1).
# --------------------------------------------------------------------------
def init_mlp_params(key, in_dim=2, hidden=HIDDEN, out_dim=1):
    keys = jax.random.split(key, 6)

    def lin(kw, kb, fan_in, fan_out):
        bound = 1.0 / math.sqrt(fan_in)
        w = jax.random.uniform(kw, (fan_out, fan_in), jnp.float32, -bound, bound)
        b = jax.random.uniform(kb, (fan_out, 1), jnp.float32, -bound, bound)
        return w, b

    w1, b1 = lin(keys[0], keys[1], in_dim, hidden)     # (H, 2), (H, 1)
    w2, b2 = lin(keys[2], keys[3], hidden, hidden)     # (H, H), (H, 1)
    w3, b3 = lin(keys[4], keys[5], hidden, out_dim)    # (1, H), (1, 1)
    return (w1, b1, w2, b2, w3.T, b3)                  # store w3 as (H, 1)


# --------------------------------------------------------------------------
# Pure-JAX reference / fallback with the same casting behaviour as the kernel.
# --------------------------------------------------------------------------
def mlp_forward_ref(S, tau, params, compute_dtype=jnp.float32):
    w1, b1, w2, b2, w3t, b3 = params
    x = jnp.concatenate([S.astype(jnp.float32), tau.astype(jnp.float32)], axis=1)
    pre1 = x @ w1.T + b1.T                                             # (N, H) f32
    h1 = jnp.tanh(pre1.astype(compute_dtype))
    pre2 = jnp.dot(h1, w2.T.astype(compute_dtype),
                   preferred_element_type=jnp.float32) + b2.T          # (N, H) f32
    h2 = jnp.tanh(pre2.astype(compute_dtype))
    return h2.astype(jnp.float32) @ w3t + b3                           # (N, 1)


# --------------------------------------------------------------------------
# EuropeanPINN equivalent (forward pass only).
# --------------------------------------------------------------------------
class EuropeanPINNPallas:
    # Below this batch size the fixed pallas_call launch + pad/slice overhead
    # dominates; a plain XLA path is faster for the tiny demo-style batches.
    _PALLAS_MIN_BATCH = 1024

    def __init__(self, params, K, T, r, sigma, S_inf=None, option_type="put"):
        self.params = params
        self.type = option_type
        self.K = jnp.asarray(K, jnp.float32)
        self.T = jnp.asarray(T, jnp.float32)
        self.r = jnp.asarray(r, jnp.float32)
        self.sigma = jnp.asarray(sigma, jnp.float32)
        self.S_inf = jnp.asarray(S_inf if S_inf is not None else 3.0 * K, jnp.float32)
        self.compute_dtype = default_compute_dtype()

    def forward(self, S, tau, *, force_pallas=False):
        # torch.cat((S, tau), dim=1) -> V_nn; the concat is fused into the kernel.
        if (not force_pallas) and S.shape[0] < self._PALLAS_MIN_BATCH:
            return mlp_forward_ref(S, tau, self.params, compute_dtype=self.compute_dtype)
        return mlp_forward_pallas(S, tau, self.params, compute_dtype=self.compute_dtype)

    # TODO(synk): pde_nn / loss_* / fit rely on torch.autograd higher-order
    # gradients and an optimizer loop; they are training utilities, not part
    # of the forward hot path, so they are not reimplemented as Pallas kernels.


if __name__ == "__main__":
    key = jax.random.PRNGKey(0)
    kp, ks, kt = jax.random.split(key, 3)

    K_strike, T_mat, r_rate, sigma_vol = 1.0, 1.0, 0.05, 0.2
    params = init_mlp_params(kp)
    model = EuropeanPINNPallas(params, K_strike, T_mat, r_rate, sigma_vol)

    cd = default_compute_dtype()
    # bf16 tanh (v6e/v7x) cannot meet 1e-5; compare against a ref that mirrors
    # the same activation quantization with a matching tolerance.
    tol = 1e-5 if cd == jnp.float32 else 2e-2

    def check(N, key_s, key_t):
        S = jax.random.uniform(key_s, (N, 1), jnp.float32) * model.S_inf
        tau = jax.random.uniform(key_t, (N, 1), jnp.float32) * model.T
        V = jax.block_until_ready(mlp_forward_pallas(S, tau, params, compute_dtype=cd))
        V_ref = mlp_forward_ref(S, tau, params, compute_dtype=cd)
        assert V.shape == (N, 1)
        assert jnp.allclose(V, V_ref, atol=tol, rtol=tol), (N, float(jnp.abs(V - V_ref).max()))
        return S, tau

    # 1) Small batch like the torch usage (S, tau are (N, 1) column vectors).
    S16, tau16 = check(16, *jax.random.split(ks))
    # 2) Pad/slice path (N not a lane multiple).
    check(200, *jax.random.split(kt))
    # 3) Larger batch exercising the tile/grid selection (and the 2-step
    #    parallel grid on dual-TensorCore chips).
    check(4096, *jax.random.split(jax.random.fold_in(key, 7)))

    # Class-level forward (auto backend: pure-JAX fallback for tiny batches).
    V_auto = jax.block_until_ready(model.forward(S16, tau16))
    assert V_auto.shape == (16, 1)

    print("KERNEL_OK")
</pallas_src>

<mosaic_0001>
module attributes {stable_mosaic.version = 11 : i64} {
  func.func @pinn_mlp_kernel(%arg0: i32, %arg1: memref<1x128xf32, #tpu.memory_space<vmem>>, %arg2: memref<1x128xf32, #tpu.memory_space<vmem>>, %arg3: memref<32x1xf32, #tpu.memory_space<vmem>>, %arg4: memref<32x1xf32, #tpu.memory_space<vmem>>, %arg5: memref<32x1xf32, #tpu.memory_space<vmem>>, %arg6: memref<32x32xf32, #tpu.memory_space<vmem>>, %arg7: memref<32x1xf32, #tpu.memory_space<vmem>>, %arg8: memref<32x1xf32, #tpu.memory_space<vmem>>, %arg9: memref<1x1xf32, #tpu.memory_space<vmem>>, %arg10: memref<1x128xf32, #tpu.memory_space<vmem>>) attributes {dimension_semantics = [#tpu.dimension_semantics<parallel>], iteration_bounds = array<i64: 1>, scalar_prefetch = 0 : i64, scratch_operands = 0 : i64, tpu.core_type = #tpu.core_type<tc>, window_params = [{transform_indices = @transform_0, window_bounds = array<i64: 1, 128>}, {transform_indices = @transform_1, window_bounds = array<i64: 1, 128>}, {pipeline_mode = #tpu.pipeline_mode<synchronous>, transform_indices = @transform_2, window_bounds = array<i64: 32, 1>}, {pipeline_mode = #tpu.pipeline_mode<synchronous>, transform_indices = @transform_3, window_bounds = array<i64: 32, 1>}, {pipeline_mode = #tpu.pipeline_mode<synchronous>, transform_indices = @transform_4, window_bounds = array<i64: 32, 1>}, {pipeline_mode = #tpu.pipeline_mode<synchronous>, transform_indices = @transform_5, window_bounds = array<i64: 32, 32>}, {pipeline_mode = #tpu.pipeline_mode<synchronous>, transform_indices = @transform_6, window_bounds = array<i64: 32, 1>}, {pipeline_mode = #tpu.pipeline_mode<synchronous>, transform_indices = @transform_7, window_bounds = array<i64: 32, 1>}, {pipeline_mode = #tpu.pipeline_mode<synchronous>, transform_indices = @transform_8, window_bounds = array<i64: 1, 1>}, {transform_indices = @transform_9, window_bounds = array<i64: 1, 128>}]} {
    %c0 = arith.constant 0 : index
    %c0_0 = arith.constant 0 : index
    %0 = vector.load %arg1[%c0, %c0_0] : memref<1x128xf32, #tpu.memory_space<vmem>>, vector<1x128xf32>
    %c0_1 = arith.constant 0 : index
    %c0_2 = arith.constant 0 : index
    %1 = vector.load %arg2[%c0_1, %c0_2] : memref<1x128xf32, #tpu.memory_space<vmem>>, vector<1x128xf32>
    %c0_3 = arith.constant 0 : index
    %c0_4 = arith.constant 0 : index
    %2 = vector.load %arg3[%c0_3, %c0_4] : memref<32x1xf32, #tpu.memory_space<vmem>>, vector<32x1xf32>
    %3 = vector.broadcast %2 : vector<32x1xf32> to vector<32x128xf32>
    %4 = vector.broadcast %0 : vector<1x128xf32> to vector<32x128xf32>
    %5 = arith.mulf %3, %4 : vector<32x128xf32>
    %c0_5 = arith.constant 0 : index
    %c0_6 = arith.constant 0 : index
    %6 = vector.load %arg4[%c0_5, %c0_6] : memref<32x1xf32, #tpu.memory_space<vmem>>, vector<32x1xf32>
    %7 = vector.broadcast %6 : vector<32x1xf32> to vector<32x128xf32>
    %8 = vector.broadcast %1 : vector<1x128xf32> to vector<32x128xf32>
    %9 = arith.mulf %7, %8 : vector<32x128xf32>
    %10 = arith.addf %5, %9 : vector<32x128xf32>
    %c0_7 = arith.constant 0 : index
    %c0_8 = arith.constant 0 : index
    %11 = vector.load %arg5[%c0_7, %c0_8] : memref<32x1xf32, #tpu.memory_space<vmem>>, vector<32x1xf32>
    %12 = vector.broadcast %11 : vector<32x1xf32> to vector<32x128xf32>
    %13 = arith.addf %10, %12 : vector<32x128xf32>
    %14 = math.tanh %13 : vector<32x128xf32>
    %c0_9 = arith.constant 0 : index
    %c0_10 = arith.constant 0 : index
    %15 = vector.load %arg6[%c0_9, %c0_10] : memref<32x32xf32, #tpu.memory_space<vmem>>, vector<32x32xf32>
    %cst = arith.constant dense<0.000000e+00> : vector<32x128xf32>
    %16 = tpu.matmul %15, %14, %cst {dimension_numbers = #tpu.dot_dimension_numbers<[1], [0], [0], [1], [0, 0, 1, 1], [], []>} : vector<32x32xf32>, vector<32x128xf32>, vector<32x128xf32> -> vector<32x128xf32>
    %c0_11 = arith.constant 0 : index
    %c0_12 = arith.constant 0 : index
    %17 = vector.load %arg7[%c0_11, %c0_12] : memref<32x1xf32, #tpu.memory_space<vmem>>, vector<32x1xf32>
    %18 = vector.broadcast %17 : vector<32x1xf32> to vector<32x128xf32>
    %19 = arith.addf %16, %18 : vector<32x128xf32>
    %20 = math.tanh %19 : vector<32x128xf32>
    %c0_13 = arith.constant 0 : index
    %c0_14 = arith.constant 0 : index
    %21 = vector.load %arg8[%c0_13, %c0_14] : memref<32x1xf32, #tpu.memory_space<vmem>>, vector<32x1xf32>
    %22 = vector.broadcast %21 : vector<32x1xf32> to vector<32x128xf32>
    %23 = arith.mulf %22, %20 : vector<32x128xf32>
    %cst_15 = arith.constant dense<0.000000e+00> : vector<128xf32>
    %24 = vector.multi_reduction <add>, %23, %cst_15 [0] : vector<32x128xf32> to vector<128xf32>
    %25 = vector.shape_cast %24 : vector<128xf32> to vector<1x128xf32>
    %c0_16 = arith.constant 0 : index
    %c0_17 = arith.constant 0 : index
    %26 = vector.load %arg9[%c0_16, %c0_17] : memref<1x1xf32, #tpu.memory_space<vmem>>, vector<1x1xf32>
    %27 = vector.broadcast %26 : vector<1x1xf32> to vector<1x128xf32>
    %28 = arith.addf %25, %27 : vector<1x128xf32>
    %c0_18 = arith.constant 0 : index
    %c0_19 = arith.constant 0 : index
    %29 = vector.load %arg10[%c0_18, %c0_19] : memref<1x128xf32, #tpu.memory_space<vmem>>, vector<1x128xf32>
    tpu.vector_store %arg10[%c0_18, %c0_19], %28 {strides = array<i32>} : memref<1x128xf32, #tpu.memory_space<vmem>>, vector<1x128xf32>,
    return
  }
  func.func @transform_0(%arg0: i32) -> (i32, i32) {
    %c0_i32 = arith.constant 0 : i32
    %c0_i32_0 = arith.constant 0 : i32
    return %c0_i32, %arg0 : i32, i32
  }
  func.func @transform_1(%arg0: i32) -> (i32, i32) {
    %c0_i32 = arith.constant 0 : i32
    %c0_i32_0 = arith.constant 0 : i32
    return %c0_i32, %arg0 : i32, i32
  }
  func.func @transform_2(%arg0: i32) -> (i32, i32) {
    %c0_i32 = arith.constant 0 : i32
    %c0_i32_0 = arith.constant 0 : i32
    %c0_i32_1 = arith.constant 0 : i32
    return %c0_i32, %c0_i32_0 : i32, i32
  }
  func.func @transform_3(%arg0: i32) -> (i32, i32) {
    %c0_i32 = arith.constant 0 : i32
    %c0_i32_0 = arith.constant 0 : i32
    %c0_i32_1 = arith.constant 0 : i32
    return %c0_i32, %c0_i32_0 : i32, i32
  }
  func.func @transform_4(%arg0: i32) -> (i32, i32) {
    %c0_i32 = arith.constant 0 : i32
    %c0_i32_0 = arith.constant 0 : i32
    %c0_i32_1 = arith.constant 0 : i32
    return %c0_i32, %c0_i32_0 : i32, i32
  }
  func.func @transform_5(%arg0: i32) -> (i32, i32) {
    %c0_i32 = arith.constant 0 : i32
    %c0_i32_0 = arith.constant 0 : i32
    %c0_i32_1 = arith.constant 0 : i32
    return %c0_i32, %c0_i32_0 : i32, i32
  }
  func.func @transform_6(%arg0: i32) -> (i32, i32) {
    %c0_i32 = arith.constant 0 : i32
    %c0_i32_0 = arith.constant 0 : i32
    %c0_i32_1 = arith.constant 0 : i32
    return %c0_i32, %c0_i32_0 : i32, i32
  }
  func.func @transform_7(%arg0: i32) -> (i32, i32) {
    %c0_i32 = arith.constant 0 : i32
    %c0_i32_0 = arith.constant 0 : i32
    %c0_i32_1 = arith.constant 0 : i32
    return %c0_i32, %c0_i32_0 : i32, i32
  }
  func.func @transform_8(%arg0: i32) -> (i32, i32) {
    %c0_i32 = arith.constant 0 : i32
    %c0_i32_0 = arith.constant 0 : i32
    %c0_i32_1 = arith.constant 0 : i32
    return %c0_i32, %c0_i32_0 : i32, i32
  }
  func.func @transform_9(%arg0: i32) -> (i32, i32) {
    %c0_i32 = arith.constant 0 : i32
    %c0_i32_0 = arith.constant 0 : i32
    return %c0_i32, %arg0 : i32, i32
  }
}

</mosaic_0001>

<llo_original>
// kernel: tpu_custom_call.1
$region0: #{tpu_custom_call.1}
  #allocation0 [shape = 'u32[]', space=smem, size = 0x4, offset = 0x4, fixed_abs, tag = 'smem constant byte address 0x4 - core index']
  #allocation1 [shape = 'u32[144,128]{1,0:T(1,128)}', space=vmem, size = 0x12000, scoped, tag = 'internal scratch']
  #allocation2 [shape = 'f32[1,1]{1,0:T(1,128)S(1)}', space=vmem, size = 0x200, scoped, tag = 'scoped memory for tpu_custom_call.1']
  %s0 = inlined_call_operand.vmem [shape: f32[1,128], index: 0, kind: input, shape index: {}]
  %s1 = inlined_call_operand.vmem [shape: f32[1,128], index: 1, kind: input, shape index: {}]
  %s2 = inlined_call_operand.vmem [shape: f32[32,1], index: 2, kind: input, shape index: {}]
  %s3 = inlined_call_operand.vmem [shape: f32[32,1], index: 3, kind: input, shape index: {}]
  %s4 = inlined_call_operand.vmem [shape: f32[32,1], index: 4, kind: input, shape index: {}]
  %s5 = inlined_call_operand.vmem [shape: f32[32,32], index: 5, kind: input, shape index: {}]
  %s6 = inlined_call_operand.vmem [shape: f32[32,1], index: 6, kind: input, shape index: {}]
  %s7 = inlined_call_operand.vmem [shape: f32[32,1], index: 7, kind: input, shape index: {}]
  %s8 = inlined_call_operand.<no memory space> [shape: f32[1,1], index: 8, kind: input, shape index: {}]
  %s9 = inlined_call_operand.hbm [shape: f32[1,128], index: 9, kind: output, shape index: {}]
  %s10 = sld [smem:[#allocation0]]
  $region46: #{tpu_custom_call.1} parent=0
    _
  %s12 = ssub.s32 1, %s10
  %s13 = scalar_select 0, %s12, %s10
  %v14 = vstv %s8
  %15 = vst [vmem:[#allocation2] sm:$0x1] %v14
  $region1: #{tpu_custom_call.1} parent=0
    #allocation3 [shape = 'u8[512]{0}', space=vmem, size = 0x400, scoped, tag = 'output window, operand 0, single buffered']
    #allocation4 [shape = 's32[1]{0}', space=sflag, size = 0x4, scoped, tag = 'scoped memory for tpu_custom_call.1']
    %16 = vsyncpa [#allocation4], 0
    // Predicated region
    $region2: #{tpu_custom_call.1} parent=1 // pred_check
      _
    $region3: #{tpu_custom_call.1} parent=1 // pred_check_branch
      %18 = sbr.rel (0) target = $region5
    $region4: #{tpu_custom_call.1} parent=1 // pred_region
      _
    $region5: #{tpu_custom_call.1} parent=1 // pred_fallthru
      _
    // Predicated region
    $region6: #{tpu_custom_call.1} parent=1 // pred_check
      _
    $region7: #{tpu_custom_call.1} parent=1 // pred_check_branch
      %20 = sbr.rel (0) target = $region9
    $region8: #{tpu_custom_call.1} parent=1 // pred_region
      _
    $region9: #{tpu_custom_call.1} parent=1 // pred_fallthru
      _
    // Predicated region
    $region10: #{tpu_custom_call.1} parent=1 // pred_check
      _
    $region11: #{tpu_custom_call.1} parent=1 // pred_check_branch
      %22 = sbr.rel (0) target = $region13
    $region12: #{tpu_custom_call.1} parent=1 // pred_region
      _
    $region13: #{tpu_custom_call.1} parent=1 // pred_fallthru
      _
    // Predicated region
    $region14: #{tpu_custom_call.1} parent=1 // pred_check
      _
    $region15: #{tpu_custom_call.1} parent=1 // pred_check_branch
      %24 = sbr.rel (0) target = $region17
    $region16: #{tpu_custom_call.1} parent=1 // pred_region
      _
    $region17: #{tpu_custom_call.1} parent=1 // pred_fallthru
      _
    // Predicated region
    $region18: #{tpu_custom_call.1} parent=1 // pred_check
      _
    $region19: #{tpu_custom_call.1} parent=1 // pred_check_branch
      %26 = sbr.rel (0) target = $region21
    $region20: #{tpu_custom_call.1} parent=1 // pred_region
      _
    $region21: #{tpu_custom_call.1} parent=1 // pred_fallthru
      _
    // Predicated region
    $region22: #{tpu_custom_call.1} parent=1 // pred_check
      _
    $region23: #{tpu_custom_call.1} parent=1 // pred_check_branch
      %28 = sbr.rel (0) target = $region25
    $region24: #{tpu_custom_call.1} parent=1 // pred_region
      _
    $region25: #{tpu_custom_call.1} parent=1 // pred_fallthru
      _
    // Predicated region
    $region26: #{tpu_custom_call.1} parent=1 // pred_check
      _
    $region27: #{tpu_custom_call.1} parent=1 // pred_check_branch
      %30 = sbr.rel (0) target = $region29
    $region28: #{tpu_custom_call.1} parent=1 // pred_region
      _
    $region29: #{tpu_custom_call.1} parent=1 // pred_fallthru
      _
    // Predicated region
    $region30: #{tpu_custom_call.1} parent=1 // pred_check
      _
    $region31: #{tpu_custom_call.1} parent=1 // pred_check_branch
      %32 = sbr.rel (0) target = $region33
    $region32: #{tpu_custom_call.1} parent=1 // pred_region
      _
    $region33: #{tpu_custom_call.1} parent=1 // pred_fallthru
      _
    // Predicated region
    $region34: #{tpu_custom_call.1} parent=1 // pred_check
      _
    $region35: #{tpu_custom_call.1} parent=1 // pred_check_branch
      %34 = sbr.rel (0) target = $region37
    $region36: #{tpu_custom_call.1} parent=1 // pred_region
      _
    $region37: #{tpu_custom_call.1} parent=1 // pred_fallthru
      _
    %v35 = vld [vmem:[%s0] sm:$0x1]
    %v36 = vld [vmem:[%s1] sm:$0x1]
    %v37 = vld [vmem:[%s2] sm:$0xff]
    %v38 = vld [vmem:[%s2 + $0x8] sm:$0xff]
    %v39 = vld [vmem:[%s2 + $0x10] sm:$0xff]
    %v40 = vld [vmem:[%s2 + $0x18] sm:$0xff]
    %42 = vset.pattern.permute.xlu0 0
    %43 = vperm.xlu0 %42, %v37
    %v44 = vpop.permute.xlu0 %43
    %47 = vset.pattern.permute.xlu0 0
    %48 = vperm.xlu0 %47, %v38
    %v49 = vpop.permute.xlu0 %48
    %52 = vset.pattern.permute.xlu0 0
    %53 = vperm.xlu0 %52, %v39
    %v54 = vpop.permute.xlu0 %53
    %57 = vset.pattern.permute.xlu0 0
    %58 = vperm.xlu0 %57, %v40
    %v59 = vpop.permute.xlu0 %58
    %v62 = vlaneseq
    %v63 = vshrl.u32 %v62, 7
    %v64 = vsub.s32 0, %v63
    %v65 = vrot.slane %v35, %v64
    %v67 = vmul.f32 %v44, %v65
    %v68 = vmul.f32 %v49, %v65
    %v69 = vmul.f32 %v54, %v65
    %v70 = vmul.f32 %v59, %v65
    %v71 = vld [vmem:[%s3] sm:$0xff]
    %v72 = vld [vmem:[%s3 + $0x8] sm:$0xff]
    %v73 = vld [vmem:[%s3 + $0x10] sm:$0xff]
    %v74 = vld [vmem:[%s3 + $0x18] sm:$0xff]
    %76 = vset.pattern.permute.xlu0 0
    %77 = vperm.xlu0 %76, %v71
    %v78 = vpop.permute.xlu0 %77
    %81 = vset.pattern.permute.xlu0 0
    %82 = vperm.xlu0 %81, %v72
    %v83 = vpop.permute.xlu0 %82
    %86 = vset.pattern.permute.xlu0 0
    %87 = vperm.xlu0 %86, %v73
    %v88 = vpop.permute.xlu0 %87
    %91 = vset.pattern.permute.xlu0 0
    %92 = vperm.xlu0 %91, %v74
    %v93 = vpop.permute.xlu0 %92
    %v96 = vlaneseq
    %v97 = vshrl.u32 %v96, 7
    %v98 = vsub.s32 0, %v97
    %v99 = vrot.slane %v36, %v98
    %v101 = vmul.f32 %v78, %v99
    %v102 = vmul.f32 %v83, %v99
    %v103 = vmul.f32 %v88, %v99
    %v104 = vmul.f32 %v93, %v99
    %v105 = vadd.f32 %v67, %v101
    %v106 = vadd.f32 %v68, %v102
    %v107 = vadd.f32 %v69, %v103
    %v108 = vadd.f32 %v70, %v104
    %v109 = vld [vmem:[%s4] sm:$0xff]
    %v110 = vld [vmem:[%s4 + $0x8] sm:$0xff]
    %v111 = vld [vmem:[%s4 + $0x10] sm:$0xff]
    %v112 = vld [vmem:[%s4 + $0x18] sm:$0xff]
    %114 = vset.pattern.permute.xlu0 0
    %115 = vperm.xlu0 %114, %v109
    %v116 = vpop.permute.xlu0 %115
    %119 = vset.pattern.permute.xlu0 0
    %120 = vperm.xlu0 %119, %v110
    %v121 = vpop.permute.xlu0 %120
    %124 = vset.pattern.permute.xlu0 0
    %125 = vperm.xlu0 %124, %v111
    %v126 = vpop.permute.xlu0 %125
    %129 = vset.pattern.permute.xlu0 0
    %130 = vperm.xlu0 %129, %v112
    %v131 = vpop.permute.xlu0 %130
    %v133 = vadd.f32 %v105, %v116
    %v134 = vadd.f32 %v106, %v121
    %v135 = vadd.f32 %v107, %v126
    %v136 = vadd.f32 %v108, %v131
    %v137 = vtanh.pop %v133
    %v138 = vtanh.pop %v134
    %v139 = vtanh.pop %v135
    %v140 = vtanh.pop %v136
    %v141 = vld [vmem:[%s5] sm:$0xff]
    %v142 = vld [vmem:[%s5 + $0x8] sm:$0xff]
    %v143 = vld [vmem:[%s5 + $0x10] sm:$0xff]
    %v144 = vld [vmem:[%s5 + $0x18] sm:$0xff]
    %v145 = vld [vmem:[%s6] sm:$0xff]
    %v146 = vld [vmem:[%s6 + $0x8] sm:$0xff]
    %v147 = vld [vmem:[%s6 + $0x10] sm:$0xff]
    %v148 = vld [vmem:[%s6 + $0x18] sm:$0xff]
    %150 = vset.pattern.permute.xlu0 0
    %151 = vperm.xlu0 %150, %v145
    %v152 = vpop.permute.xlu0 %151
    %155 = vset.pattern.permute.xlu0 0
    %156 = vperm.xlu0 %155, %v146
    %v157 = vpop.permute.xlu0 %156
    %160 = vset.pattern.permute.xlu0 0
    %161 = vperm.xlu0 %160, %v147
    %v162 = vpop.permute.xlu0 %161
    %165 = vset.pattern.permute.xlu0 0
    %166 = vperm.xlu0 %165, %v148
    %v167 = vpop.permute.xlu0 %166
    %vm169 = vcmask 261120
    %v171 = vsel %vm169, %v141, 0
    %v174 = vsel %vm169, %v142, 0
    %v177 = vsel %vm169, %v143, 0
    %v180 = vsel %vm169, %v144, 0
    %182 = vmatprep.subr.mxu0 0.0
    %183 = vmatpush1.msra.mxu0 %v137
    %184 = vmatprep.subr.mxu0 0.0
    %185 = vmatpush1.msra.mxu0 %v138
    %186 = vmatprep.subr.mxu0 0.0
    %187 = vmatpush1.msra.mxu0 %v139
    %188 = vmatprep.subr.mxu0 0.0
    %189 = vmatpush1.msra.mxu0 %v140
    %190 = vmatprep.subr.mxu0 0.0
    %191 = vmatpush1.msra.mxu0 0.0
    %192 = vmatprep.subr.mxu0 0.0
    %193 = vmatpush1.msra.mxu0 0.0
    %194 = vmatprep.subr.mxu0 0.0
    %195 = vmatpush1.msra.mxu0 0.0
    %196 = vmatprep.subr.mxu0 0.0
    %197 = vmatpush1.msra.mxu0 0.0
    %198 = vmatprep.subr.mxu0 0.0
    %199 = vmatpush1.msra.mxu0 0.0
    %200 = vmatprep.subr.mxu0 0.0
    %201 = vmatpush1.msra.mxu0 0.0
    %202 = vmatprep.subr.mxu0 0.0
    %203 = vmatpush1.msra.mxu0 0.0
    %204 = vmatprep.subr.mxu0 0.0
    %205 = vmatpush1.msra.mxu0 0.0
    %206 = vmatprep.subr.mxu0 0.0
    %207 = vmatpush1.msra.mxu0 0.0
    %208 = vmatprep.subr.mxu0 0.0
    %209 = vmatpush1.msra.mxu0 0.0
    %210 = vmatprep.subr.mxu0 0.0
    %211 = vmatpush1.msra.mxu0 0.0
    %212 = vmatprep.subr.mxu0 0.0
    %213 = vmatpush1.msra.mxu0 0.0
    %214 = vmatprep.subr.mxu0 0.0
    %215 = vmatpush1.msra.mxu0 0.0
    %216 = vmatprep.subr.mxu0 0.0
    %217 = vmatpush1.msra.mxu0 0.0
    %218 = vmatprep.subr.mxu0 0.0
    %219 = vmatpush1.msra.mxu0 0.0
    %220 = vmatprep.subr.mxu0 0.0
    %221 = vmatpush1.msra.mxu0 0.0
    %222 = vmatprep.subr.mxu0 0.0
    %223 = vmatpush1.msra.mxu0 0.0
    %224 = vmatprep.subr.mxu0 0.0
    %225 = vmatpush1.msra.mxu0 0.0
    %226 = vmatprep.subr.mxu0 0.0
    %227 = vmatpush1.msra.mxu0 0.0
    %228 = vmatprep.subr.mxu0 0.0
    %229 = vmatpush1.msra.mxu0 0.0
    %230 = vmatprep.subr.mxu0 0.0
    %231 = vmatpush1.msra.mxu0 0.0
    %232 = vmatprep.subr.mxu0 0.0
    %233 = vmatpush1.msra.mxu0 0.0
    %234 = vmatprep.subr.mxu0 0.0
    %235 = vmatpush1.msra.mxu0 0.0
    %236 = vmatprep.subr.mxu0 0.0
    %237 = vmatpush1.msra.mxu0 0.0
    %238 = vmatprep.subr.mxu0 0.0
    %239 = vmatpush1.msra.mxu0 0.0
    %240 = vmatprep.subr.mxu0 0.0
    %241 = vmatpush1.msra.mxu0 0.0
    %242 = vmatprep.subr.mxu0 0.0
    %243 = vmatpush1.msra.mxu0 0.0
    %244 = vmatprep.subr.mxu0 0.0
    %245 = vmatpush1.msra.mxu0 0.0
    %246 = vmatprep.mubr.f32.mxu0 0.0
    %247 = vmatmul.mubr.f32.gmra.mrb[0].mxu0 %v171
    %v248 = vpop.f32.mrb[0].mxu0
    %v249 = vadd.f32 %v152, %v248
    %v250 = vpop.f32.mrb[0].mxu0
    %251 = vmatprep.mubr.f32.mxu0 0.0
    %252 = vmatmul.mubr.f32.gmra.mrb[0].mxu0 %v174
    %v253 = vpop.f32.mrb[0].mxu0
    %v254 = vadd.f32 %v157, %v253
    %v255 = vpop.f32.mrb[0].mxu0
    %256 = vmatprep.mubr.f32.mxu0 0.0
    %257 = vmatmul.mubr.f32.gmra.mrb[0].mxu0 %v177
    %v258 = vpop.f32.mrb[0].mxu0
    %v259 = vadd.f32 %v162, %v258
    %v260 = vpop.f32.mrb[0].mxu0
    %261 = vmatprep.mubr.f32.mxu0 0.0
    %262 = vmatmul.mubr.f32.gmra.mrb[0].mxu0 %v180
    %v263 = vpop.f32.mrb[0].mxu0
    %v264 = vadd.f32 %v167, %v263
    %v265 = vpop.f32.mrb[0].mxu0
    %266 = vdwg.mxu0
    %v267 = vtanh.pop %v249
    %v268 = vtanh.pop %v254
    %v269 = vtanh.pop %v259
    %v270 = vtanh.pop %v264
    %v271 = vld [vmem:[%s7] sm:$0xff]
    %v272 = vld [vmem:[%s7 + $0x8] sm:$0xff]
    %v273 = vld [vmem:[%s7 + $0x10] sm:$0xff]
    %v274 = vld [vmem:[%s7 + $0x18] sm:$0xff]
    %276 = vset.pattern.permute.xlu0 0
    %277 = vperm.xlu0 %276, %v271
    %v278 = vpop.permute.xlu0 %277
    %281 = vset.pattern.permute.xlu0 0
    %282 = vperm.xlu0 %281, %v272
    %v283 = vpop.permute.xlu0 %282
    %286 = vset.pattern.permute.xlu0 0
    %287 = vperm.xlu0 %286, %v273
    %v288 = vpop.permute.xlu0 %287
    %291 = vset.pattern.permute.xlu0 0
    %292 = vperm.xlu0 %291, %v274
    %v293 = vpop.permute.xlu0 %292
    %v295 = vmul.f32 %v278, %v267
    %v296 = vmul.f32 %v283, %v268
    %v297 = vmul.f32 %v288, %v269
    %v298 = vmul.f32 %v293, %v270
    %v299 = vadd.f32 %v295, %v296
    %v300 = vadd.f32 %v299, %v297
    %v301 = vadd.f32 %v300, %v298
    %v302 = vrot.slane %v301, 4
    %v303 = vadd.f32 %v301, %v302
    %v304 = vrot.slane %v303, 2
    %v305 = vadd.f32 %v303, %v304
    %v306 = vrot.slane %v305, 1
    %v307 = vadd.f32 %v305, %v306
    %v308 = vld [vmem:[#allocation2] sm:$0x1]
    %310 = vset.pattern.permute.xlu0 0
    %311 = vperm.xlu0 %310, %v308
    %v312 = vpop.permute.xlu0 %311
    %v314 = vlaneseq
    %v315 = vshrl.u32 %v314, 7
    %v316 = vsub.s32 0, %v315
    %v317 = vrot.slane %v312, %v316
    %v318 = vadd.f32 %v307, %v317
    %319 = vst [vmem:[#allocation3] sm:$0x1] %v318
    // Predicated region
    $region38: #{tpu_custom_call.1} parent=1 // pred_check
      _
    $region39: #{tpu_custom_call.1} parent=1 // pred_check_branch
      %321 = sbr.rel (0) target = $region41
    $region40: #{tpu_custom_call.1} parent=1 // pred_region
      %s323 = ssub.s32 16, 16
      %324 = vsyncadd [#allocation4], %s323
      %s326 = sshll.u32 [#allocation3], 4
      %s327 = int_to_ptr.vmem [resolvable:$true] %s326
      %329 = dma.vmem_to_hbm [thread:$0]  %s327, 16, %s9, [#allocation4]
    $region41: #{tpu_custom_call.1} parent=1 // pred_fallthru
      _
    // Predicated region
    $region42: #{tpu_custom_call.1} parent=1 // pred_check
      _
    $region43: #{tpu_custom_call.1} parent=1 // pred_check_branch
      %331 = sbr.rel (0) target = $region45
    $region44: #{tpu_custom_call.1} parent=1 // pred_region
      %332 = dma.done [#allocation4], 16
    $region45: #{tpu_custom_call.1} parent=1 // pred_fallthru
      _
    %333 = vsyncpa [#allocation4], 1

</llo_original>
